<compile_context>
chip_gen: v6e
topology: v6e:2x2x1
jax: 0.10.0
libtpu: 0.0.40
codegen_flags: <defaults>
</compile_context>

<pallas_src>
import functools

import jax
import jax.numpy as jnp
from jax.experimental import pallas as pl
from jax.experimental.pallas import tpu as pltpu

LANES = 128


def _round_up(x, m):
    return ((x + m - 1) // m) * m


def _apply_activation(h, activation):
    if activation == "sigmoid":
        return jax.nn.sigmoid(h)
    if activation == "tanh":
        return jnp.tanh(h)
    if activation == "relu":
        return jnp.maximum(h, 0.0)
    if activation == "leakyrelu":
        return jnp.where(h > 0.0, h, 0.08 * h)
    raise ValueError("Unknown activation")


def _mlp_kernel(w1_ref, b1_ref, w2_ref, b2_ref, x_ref, o_ref, *,
                activation, chunk_rows, num_chunks):
    """One grid step over a lane-dense batch tile.

    x_ref / o_ref : VMEM, shape [2, block_rows, 128]  (feature planes, batch in
                    sublanes x lanes)
    w1_ref [6,2], b1_ref [6], w2_ref [2,6], b2_ref [2] : SMEM, torch layout.
    """
    x0_ref = x_ref.at[0]          # [block_rows, 128] view, feature 0
    x1_ref = x_ref.at[1]          # feature 1
    o0_ref = o_ref.at[0]
    o1_ref = o_ref.at[1]

    b2_0 = b2_ref[0]
    b2_1 = b2_ref[1]

    for c in range(num_chunks):   # static unroll; each chunk fits in vregs
        r = c * chunk_rows
        x0 = x0_ref[pl.ds(r, chunk_rows), :].astype(jnp.float32)
        x1 = x1_ref[pl.ds(r, chunk_rows), :].astype(jnp.float32)

        out0 = jnp.zeros_like(x0)
        out1 = jnp.zeros_like(x0)
        # fc1 -> activation -> fc2, one hidden unit at a time: 2 FMAs + bias +
        # activation + 2 output FMAs, all scalar*vector on the VPU (no MXU).
        for j in range(6):
            h = w1_ref[j, 0] * x0 + w1_ref[j, 1] * x1 + b1_ref[j]
            h = _apply_activation(h, activation)
            out0 = out0 + w2_ref[0, j] * h
            out1 = out1 + w2_ref[1, j] * h

        o0_ref[pl.ds(r, chunk_rows), :] = (out0 + b2_0).astype(o_ref.dtype)
        o1_ref[pl.ds(r, chunk_rows), :] = (out1 + b2_1).astype(o_ref.dtype)


def smallnet_forward(x, w1, b1, w2, b2, activation, *, block_rows=256):
    """x: [B, 2]; w1: [6, 2], b1: [6], w2: [2, 6], b2: [2] (torch layout).

    Returns fc2(activation(fc1(x))) with shape [B, 2].
    """
    B, f_in = x.shape
    assert f_in == 2 and w1.shape == (6, 2) and w2.shape == (2, 6)

    rows = pl.cdiv(B, LANES)
    block_rows = max(8, min(_round_up(block_rows, 8), _round_up(rows, 8)))
    rows_pad = _round_up(rows, block_rows)
    b_pad = rows_pad * LANES

    chunk_rows = 32 if block_rows % 32 == 0 else 8
    num_chunks = block_rows // chunk_rows

    # Layout flip in the wrapper: [B, 2] -> pad batch -> [2, rows_pad, 128].
    xp = jnp.pad(x, ((0, b_pad - B), (0, 0)))
    xt = jnp.transpose(xp).reshape(2, rows_pad, LANES)

    kernel = functools.partial(_mlp_kernel, activation=activation,
                               chunk_rows=chunk_rows, num_chunks=num_chunks)
    smem_spec = lambda: pl.BlockSpec(memory_space=pltpu.MemorySpace.SMEM)
    tile_spec = pl.BlockSpec((2, block_rows, LANES), lambda i: (0, i, 0))

    out3 = pl.pallas_call(
        kernel,
        out_shape=jax.ShapeDtypeStruct((2, rows_pad, LANES), x.dtype),
        grid=(rows_pad // block_rows,),
        in_specs=[smem_spec(), smem_spec(), smem_spec(), smem_spec(), tile_spec],
        out_specs=tile_spec,
        compiler_params=pltpu.CompilerParams(
            dimension_semantics=("parallel",)),
    )(w1, b1, w2, b2, xt)

    # [2, rows_pad, 128] -> [B, 2]
    return out3.reshape(2, b_pad).T[:B]


def _reference(x, w1, b1, w2, b2, activation):
    h = _apply_activation(x @ w1.T + b1, activation)
    return h @ w2.T + b2


if __name__ == "__main__":
    key = jax.random.PRNGKey(0)
    kx, k1, k2, k3, k4, kx2 = jax.random.split(key, 6)

    # torch nn.Linear layout: weight [out_features, in_features], bias [out].
    w1 = jax.random.normal(k1, (6, 2), jnp.float32) * 0.5
    b1 = jax.random.normal(k2, (6,), jnp.float32) * 0.1
    w2 = jax.random.normal(k3, (2, 6), jnp.float32) * 0.5
    b2 = jax.random.normal(k4, (2,), jnp.float32) * 0.1

    # Small batch (single tile) and a larger non-multiple-of-128 batch that
    # exercises padding + the pipelined batch grid (grid size 2).
    x_small = jax.random.normal(kx, (8, 2), jnp.float32)
    x_big = jax.random.normal(kx2, (2000, 2), jnp.float32)

    for activation in ("sigmoid", "tanh", "relu", "leakyrelu"):
        for xin, brows in ((x_small, 256), (x_big, 8)):
            out = smallnet_forward(xin, w1, b1, w2, b2, activation,
                                   block_rows=brows)
            out = jax.block_until_ready(out)
            ref = _reference(xin, w1, b1, w2, b2, activation)
            assert out.shape == xin.shape
            assert jnp.allclose(out, ref, atol=1e-5, rtol=1e-5), (
                f"mismatch: act={activation} B={xin.shape[0]}")

    print("KERNEL_OK")
</pallas_src>

<mosaic_0001>
module attributes {stable_mosaic.version = 11 : i64} {
  func.func @_mlp_kernel(%arg0: i32, %arg1: memref<6x2xf32, #tpu.memory_space<smem>>, %arg2: memref<6xf32, #tpu.memory_space<smem>>, %arg3: memref<2x6xf32, #tpu.memory_space<smem>>, %arg4: memref<2xf32, #tpu.memory_space<smem>>, %arg5: memref<2x8x128xf32, #tpu.memory_space<vmem>>, %arg6: memref<2x8x128xf32, #tpu.memory_space<vmem>>) attributes {dimension_semantics = [#tpu.dimension_semantics<parallel>], iteration_bounds = array<i64: 1>, scalar_prefetch = 0 : i64, scratch_operands = 0 : i64, tpu.core_type = #tpu.core_type<tc>, window_params = [{transform_indices = @transform_0, window_bounds = array<i64: 6, 2>}, {transform_indices = @transform_1, window_bounds = array<i64: 6>}, {transform_indices = @transform_2, window_bounds = array<i64: 2, 6>}, {transform_indices = @transform_3, window_bounds = array<i64: 2>}, {transform_indices = @transform_4, window_bounds = array<i64: 2, 8, 128>}, {transform_indices = @transform_5, window_bounds = array<i64: 2, 8, 128>}]} {
    %c0 = arith.constant 0 : index
    %0 = memref.load %arg4[%c0] : memref<2xf32, #tpu.memory_space<smem>>
    %c1 = arith.constant 1 : index
    %1 = memref.load %arg4[%c1] : memref<2xf32, #tpu.memory_space<smem>>
    %c0_i32 = arith.constant 0 : i32
    %c0_i32_0 = arith.constant 0 : i32
    %c0_i32_1 = arith.constant 0 : i32
    %2 = tpu.memref_slice %arg5[%c0_i32, %c0_i32_0, %c0_i32_1] : memref<2x8x128xf32, #tpu.memory_space<vmem>> -> memref<1x8x128xf32, #tpu.memory_space<vmem>>
    %3 = tpu.memref_squeeze %2 : memref<1x8x128xf32, #tpu.memory_space<vmem>> -> memref<8x128xf32, #tpu.memory_space<vmem>>
    %c0_2 = arith.constant 0 : index
    %c0_3 = arith.constant 0 : index
    %4 = vector.load %3[%c0_2, %c0_3] : memref<8x128xf32, #tpu.memory_space<vmem>>, vector<8x128xf32>
    %c1_i32 = arith.constant 1 : i32
    %c0_i32_4 = arith.constant 0 : i32
    %c0_i32_5 = arith.constant 0 : i32
    %5 = tpu.memref_slice %arg5[%c1_i32, %c0_i32_4, %c0_i32_5] : memref<2x8x128xf32, #tpu.memory_space<vmem>> -> memref<1x8x128xf32, #tpu.memory_space<vmem>>
    %6 = tpu.memref_squeeze %5 : memref<1x8x128xf32, #tpu.memory_space<vmem>> -> memref<8x128xf32, #tpu.memory_space<vmem>>
    %c0_6 = arith.constant 0 : index
    %c0_7 = arith.constant 0 : index
    %7 = vector.load %6[%c0_6, %c0_7] : memref<8x128xf32, #tpu.memory_space<vmem>>, vector<8x128xf32>
    %cst = arith.constant 0.000000e+00 : f32
    %8 = vector.broadcast %cst : f32 to vector<8x128xf32>
    %cst_8 = arith.constant 0.000000e+00 : f32
    %9 = vector.broadcast %cst_8 : f32 to vector<8x128xf32>
    %c0_9 = arith.constant 0 : index
    %c0_10 = arith.constant 0 : index
    %10 = memref.load %arg1[%c0_9, %c0_10] : memref<6x2xf32, #tpu.memory_space<smem>>
    %11 = vector.broadcast %10 : f32 to vector<8x128xf32>
    %12 = arith.mulf %11, %4 : vector<8x128xf32>
    %c0_11 = arith.constant 0 : index
    %c1_12 = arith.constant 1 : index
    %13 = memref.load %arg1[%c0_11, %c1_12] : memref<6x2xf32, #tpu.memory_space<smem>>
    %14 = vector.broadcast %13 : f32 to vector<8x128xf32>
    %15 = arith.mulf %14, %7 : vector<8x128xf32>
    %16 = arith.addf %12, %15 : vector<8x128xf32>
    %c0_13 = arith.constant 0 : index
    %17 = memref.load %arg2[%c0_13] : memref<6xf32, #tpu.memory_space<smem>>
    %18 = vector.broadcast %17 : f32 to vector<8x128xf32>
    %19 = arith.addf %16, %18 : vector<8x128xf32>
    %20 = arith.negf %19 : vector<8x128xf32>
    %21 = math.exp %20 : vector<8x128xf32>
    %cst_14 = arith.constant 1.000000e+00 : f32
    %22 = vector.broadcast %cst_14 : f32 to vector<8x128xf32>
    %23 = arith.addf %22, %21 : vector<8x128xf32>
    %24 = arith.divf %22, %23 : vector<8x128xf32>
    %c0_15 = arith.constant 0 : index
    %c0_16 = arith.constant 0 : index
    %25 = memref.load %arg3[%c0_15, %c0_16] : memref<2x6xf32, #tpu.memory_space<smem>>
    %26 = vector.broadcast %25 : f32 to vector<8x128xf32>
    %27 = arith.mulf %26, %24 : vector<8x128xf32>
    %28 = arith.addf %8, %27 : vector<8x128xf32>
    %c1_17 = arith.constant 1 : index
    %c0_18 = arith.constant 0 : index
    %29 = memref.load %arg3[%c1_17, %c0_18] : memref<2x6xf32, #tpu.memory_space<smem>>
    %30 = vector.broadcast %29 : f32 to vector<8x128xf32>
    %31 = arith.mulf %30, %24 : vector<8x128xf32>
    %32 = arith.addf %9, %31 : vector<8x128xf32>
    %c1_19 = arith.constant 1 : index
    %c0_20 = arith.constant 0 : index
    %33 = memref.load %arg1[%c1_19, %c0_20] : memref<6x2xf32, #tpu.memory_space<smem>>
    %34 = vector.broadcast %33 : f32 to vector<8x128xf32>
    %35 = arith.mulf %34, %4 : vector<8x128xf32>
    %c1_21 = arith.constant 1 : index
    %c1_22 = arith.constant 1 : index
    %36 = memref.load %arg1[%c1_21, %c1_22] : memref<6x2xf32, #tpu.memory_space<smem>>
    %37 = vector.broadcast %36 : f32 to vector<8x128xf32>
    %38 = arith.mulf %37, %7 : vector<8x128xf32>
    %39 = arith.addf %35, %38 : vector<8x128xf32>
    %c1_23 = arith.constant 1 : index
    %40 = memref.load %arg2[%c1_23] : memref<6xf32, #tpu.memory_space<smem>>
    %41 = vector.broadcast %40 : f32 to vector<8x128xf32>
    %42 = arith.addf %39, %41 : vector<8x128xf32>
    %43 = arith.negf %42 : vector<8x128xf32>
    %44 = math.exp %43 : vector<8x128xf32>
    %cst_24 = arith.constant 1.000000e+00 : f32
    %45 = vector.broadcast %cst_24 : f32 to vector<8x128xf32>
    %46 = arith.addf %45, %44 : vector<8x128xf32>
    %47 = arith.divf %45, %46 : vector<8x128xf32>
    %c0_25 = arith.constant 0 : index
    %c1_26 = arith.constant 1 : index
    %48 = memref.load %arg3[%c0_25, %c1_26] : memref<2x6xf32, #tpu.memory_space<smem>>
    %49 = vector.broadcast %48 : f32 to vector<8x128xf32>
    %50 = arith.mulf %49, %47 : vector<8x128xf32>
    %51 = arith.addf %28, %50 : vector<8x128xf32>
    %c1_27 = arith.constant 1 : index
    %c1_28 = arith.constant 1 : index
    %52 = memref.load %arg3[%c1_27, %c1_28] : memref<2x6xf32, #tpu.memory_space<smem>>
    %53 = vector.broadcast %52 : f32 to vector<8x128xf32>
    %54 = arith.mulf %53, %47 : vector<8x128xf32>
    %55 = arith.addf %32, %54 : vector<8x128xf32>
    %c2 = arith.constant 2 : index
    %c0_29 = arith.constant 0 : index
    %56 = memref.load %arg1[%c2, %c0_29] : memref<6x2xf32, #tpu.memory_space<smem>>
    %57 = vector.broadcast %56 : f32 to vector<8x128xf32>
    %58 = arith.mulf %57, %4 : vector<8x128xf32>
    %c2_30 = arith.constant 2 : index
    %c1_31 = arith.constant 1 : index
    %59 = memref.load %arg1[%c2_30, %c1_31] : memref<6x2xf32, #tpu.memory_space<smem>>
    %60 = vector.broadcast %59 : f32 to vector<8x128xf32>
    %61 = arith.mulf %60, %7 : vector<8x128xf32>
    %62 = arith.addf %58, %61 : vector<8x128xf32>
    %c2_32 = arith.constant 2 : index
    %63 = memref.load %arg2[%c2_32] : memref<6xf32, #tpu.memory_space<smem>>
    %64 = vector.broadcast %63 : f32 to vector<8x128xf32>
    %65 = arith.addf %62, %64 : vector<8x128xf32>
    %66 = arith.negf %65 : vector<8x128xf32>
    %67 = math.exp %66 : vector<8x128xf32>
    %cst_33 = arith.constant 1.000000e+00 : f32
    %68 = vector.broadcast %cst_33 : f32 to vector<8x128xf32>
    %69 = arith.addf %68, %67 : vector<8x128xf32>
    %70 = arith.divf %68, %69 : vector<8x128xf32>
    %c0_34 = arith.constant 0 : index
    %c2_35 = arith.constant 2 : index
    %71 = memref.load %arg3[%c0_34, %c2_35] : memref<2x6xf32, #tpu.memory_space<smem>>
    %72 = vector.broadcast %71 : f32 to vector<8x128xf32>
    %73 = arith.mulf %72, %70 : vector<8x128xf32>
    %74 = arith.addf %51, %73 : vector<8x128xf32>
    %c1_36 = arith.constant 1 : index
    %c2_37 = arith.constant 2 : index
    %75 = memref.load %arg3[%c1_36, %c2_37] : memref<2x6xf32, #tpu.memory_space<smem>>
    %76 = vector.broadcast %75 : f32 to vector<8x128xf32>
    %77 = arith.mulf %76, %70 : vector<8x128xf32>
    %78 = arith.addf %55, %77 : vector<8x128xf32>
    %c3 = arith.constant 3 : index
    %c0_38 = arith.constant 0 : index
    %79 = memref.load %arg1[%c3, %c0_38] : memref<6x2xf32, #tpu.memory_space<smem>>
    %80 = vector.broadcast %79 : f32 to vector<8x128xf32>
    %81 = arith.mulf %80, %4 : vector<8x128xf32>
    %c3_39 = arith.constant 3 : index
    %c1_40 = arith.constant 1 : index
    %82 = memref.load %arg1[%c3_39, %c1_40] : memref<6x2xf32, #tpu.memory_space<smem>>
    %83 = vector.broadcast %82 : f32 to vector<8x128xf32>
    %84 = arith.mulf %83, %7 : vector<8x128xf32>
    %85 = arith.addf %81, %84 : vector<8x128xf32>
    %c3_41 = arith.constant 3 : index
    %86 = memref.load %arg2[%c3_41] : memref<6xf32, #tpu.memory_space<smem>>
    %87 = vector.broadcast %86 : f32 to vector<8x128xf32>
    %88 = arith.addf %85, %87 : vector<8x128xf32>
    %89 = arith.negf %88 : vector<8x128xf32>
    %90 = math.exp %89 : vector<8x128xf32>
    %cst_42 = arith.constant 1.000000e+00 : f32
    %91 = vector.broadcast %cst_42 : f32 to vector<8x128xf32>
    %92 = arith.addf %91, %90 : vector<8x128xf32>
    %93 = arith.divf %91, %92 : vector<8x128xf32>
    %c0_43 = arith.constant 0 : index
    %c3_44 = arith.constant 3 : index
    %94 = memref.load %arg3[%c0_43, %c3_44] : memref<2x6xf32, #tpu.memory_space<smem>>
    %95 = vector.broadcast %94 : f32 to vector<8x128xf32>
    %96 = arith.mulf %95, %93 : vector<8x128xf32>
    %97 = arith.addf %74, %96 : vector<8x128xf32>
    %c1_45 = arith.constant 1 : index
    %c3_46 = arith.constant 3 : index
    %98 = memref.load %arg3[%c1_45, %c3_46] : memref<2x6xf32, #tpu.memory_space<smem>>
    %99 = vector.broadcast %98 : f32 to vector<8x128xf32>
    %100 = arith.mulf %99, %93 : vector<8x128xf32>
    %101 = arith.addf %78, %100 : vector<8x128xf32>
    %c4 = arith.constant 4 : index
    %c0_47 = arith.constant 0 : index
    %102 = memref.load %arg1[%c4, %c0_47] : memref<6x2xf32, #tpu.memory_space<smem>>
    %103 = vector.broadcast %102 : f32 to vector<8x128xf32>
    %104 = arith.mulf %103, %4 : vector<8x128xf32>
    %c4_48 = arith.constant 4 : index
    %c1_49 = arith.constant 1 : index
    %105 = memref.load %arg1[%c4_48, %c1_49] : memref<6x2xf32, #tpu.memory_space<smem>>
    %106 = vector.broadcast %105 : f32 to vector<8x128xf32>
    %107 = arith.mulf %106, %7 : vector<8x128xf32>
    %108 = arith.addf %104, %107 : vector<8x128xf32>
    %c4_50 = arith.constant 4 : index
    %109 = memref.load %arg2[%c4_50] : memref<6xf32, #tpu.memory_space<smem>>
    %110 = vector.broadcast %109 : f32 to vector<8x128xf32>
    %111 = arith.addf %108, %110 : vector<8x128xf32>
    %112 = arith.negf %111 : vector<8x128xf32>
    %113 = math.exp %112 : vector<8x128xf32>
    %cst_51 = arith.constant 1.000000e+00 : f32
    %114 = vector.broadcast %cst_51 : f32 to vector<8x128xf32>
    %115 = arith.addf %114, %113 : vector<8x128xf32>
    %116 = arith.divf %114, %115 : vector<8x128xf32>
    %c0_52 = arith.constant 0 : index
    %c4_53 = arith.constant 4 : index
    %117 = memref.load %arg3[%c0_52, %c4_53] : memref<2x6xf32, #tpu.memory_space<smem>>
    %118 = vector.broadcast %117 : f32 to vector<8x128xf32>
    %119 = arith.mulf %118, %116 : vector<8x128xf32>
    %120 = arith.addf %97, %119 : vector<8x128xf32>
    %c1_54 = arith.constant 1 : index
    %c4_55 = arith.constant 4 : index
    %121 = memref.load %arg3[%c1_54, %c4_55] : memref<2x6xf32, #tpu.memory_space<smem>>
    %122 = vector.broadcast %121 : f32 to vector<8x128xf32>
    %123 = arith.mulf %122, %116 : vector<8x128xf32>
    %124 = arith.addf %101, %123 : vector<8x128xf32>
    %c5 = arith.constant 5 : index
    %c0_56 = arith.constant 0 : index
    %125 = memref.load %arg1[%c5, %c0_56] : memref<6x2xf32, #tpu.memory_space<smem>>
    %126 = vector.broadcast %125 : f32 to vector<8x128xf32>
    %127 = arith.mulf %126, %4 : vector<8x128xf32>
    %c5_57 = arith.constant 5 : index
    %c1_58 = arith.constant 1 : index
    %128 = memref.load %arg1[%c5_57, %c1_58] : memref<6x2xf32, #tpu.memory_space<smem>>
    %129 = vector.broadcast %128 : f32 to vector<8x128xf32>
    %130 = arith.mulf %129, %7 : vector<8x128xf32>
    %131 = arith.addf %127, %130 : vector<8x128xf32>
    %c5_59 = arith.constant 5 : index
    %132 = memref.load %arg2[%c5_59] : memref<6xf32, #tpu.memory_space<smem>>
    %133 = vector.broadcast %132 : f32 to vector<8x128xf32>
    %134 = arith.addf %131, %133 : vector<8x128xf32>
    %135 = arith.negf %134 : vector<8x128xf32>
    %136 = math.exp %135 : vector<8x128xf32>
    %cst_60 = arith.constant 1.000000e+00 : f32
    %137 = vector.broadcast %cst_60 : f32 to vector<8x128xf32>
    %138 = arith.addf %137, %136 : vector<8x128xf32>
    %139 = arith.divf %137, %138 : vector<8x128xf32>
    %c0_61 = arith.constant 0 : index
    %c5_62 = arith.constant 5 : index
    %140 = memref.load %arg3[%c0_61, %c5_62] : memref<2x6xf32, #tpu.memory_space<smem>>
    %141 = vector.broadcast %140 : f32 to vector<8x128xf32>
    %142 = arith.mulf %141, %139 : vector<8x128xf32>
    %143 = arith.addf %120, %142 : vector<8x128xf32>
    %c1_63 = arith.constant 1 : index
    %c5_64 = arith.constant 5 : index
    %144 = memref.load %arg3[%c1_63, %c5_64] : memref<2x6xf32, #tpu.memory_space<smem>>
    %145 = vector.broadcast %144 : f32 to vector<8x128xf32>
    %146 = arith.mulf %145, %139 : vector<8x128xf32>
    %147 = arith.addf %124, %146 : vector<8x128xf32>
    %148 = vector.broadcast %0 : f32 to vector<8x128xf32>
    %149 = arith.addf %143, %148 : vector<8x128xf32>
    %c0_i32_65 = arith.constant 0 : i32
    %c0_i32_66 = arith.constant 0 : i32
    %c0_i32_67 = arith.constant 0 : i32
    %150 = tpu.memref_slice %arg6[%c0_i32_65, %c0_i32_66, %c0_i32_67] : memref<2x8x128xf32, #tpu.memory_space<vmem>> -> memref<1x8x128xf32, #tpu.memory_space<vmem>>
    %151 = tpu.memref_squeeze %150 : memref<1x8x128xf32, #tpu.memory_space<vmem>> -> memref<8x128xf32, #tpu.memory_space<vmem>>
    %c0_68 = arith.constant 0 : index
    %c0_69 = arith.constant 0 : index
    %152 = vector.load %151[%c0_68, %c0_69] : memref<8x128xf32, #tpu.memory_space<vmem>>, vector<8x128xf32>
    tpu.vector_store %151[%c0_68, %c0_69], %149 {strides = array<i32>} : memref<8x128xf32, #tpu.memory_space<vmem>>, vector<8x128xf32>,
    %153 = vector.broadcast %1 : f32 to vector<8x128xf32>
    %154 = arith.addf %147, %153 : vector<8x128xf32>
    %c1_i32_70 = arith.constant 1 : i32
    %c0_i32_71 = arith.constant 0 : i32
    %c0_i32_72 = arith.constant 0 : i32
    %155 = tpu.memref_slice %arg6[%c1_i32_70, %c0_i32_71, %c0_i32_72] : memref<2x8x128xf32, #tpu.memory_space<vmem>> -> memref<1x8x128xf32, #tpu.memory_space<vmem>>
    %156 = tpu.memref_squeeze %155 : memref<1x8x128xf32, #tpu.memory_space<vmem>> -> memref<8x128xf32, #tpu.memory_space<vmem>>
    %c0_73 = arith.constant 0 : index
    %c0_74 = arith.constant 0 : index
    %157 = vector.load %156[%c0_73, %c0_74] : memref<8x128xf32, #tpu.memory_space<vmem>>, vector<8x128xf32>
    tpu.vector_store %156[%c0_73, %c0_74], %154 {strides = array<i32>} : memref<8x128xf32, #tpu.memory_space<vmem>>, vector<8x128xf32>,
    return
  }
  func.func @transform_0(%arg0: i32) -> (i32, i32) {
    %c0_i32 = arith.constant 0 : i32
    %c0_i32_0 = arith.constant 0 : i32
    %c0_i32_1 = arith.constant 0 : i32
    return %c0_i32, %c0_i32_0 : i32, i32
  }
  func.func @transform_1(%arg0: i32) -> i32 {
    %c0_i32 = arith.constant 0 : i32
    %c0_i32_0 = arith.constant 0 : i32
    return %c0_i32 : i32
  }
  func.func @transform_2(%arg0: i32) -> (i32, i32) {
    %c0_i32 = arith.constant 0 : i32
    %c0_i32_0 = arith.constant 0 : i32
    %c0_i32_1 = arith.constant 0 : i32
    return %c0_i32, %c0_i32_0 : i32, i32
  }
  func.func @transform_3(%arg0: i32) -> i32 {
    %c0_i32 = arith.constant 0 : i32
    %c0_i32_0 = arith.constant 0 : i32
    return %c0_i32 : i32
  }
  func.func @transform_4(%arg0: i32) -> (i32, i32, i32) {
    %c0_i32 = arith.constant 0 : i32
    %c0_i32_0 = arith.constant 0 : i32
    %c0_i32_1 = arith.constant 0 : i32
    return %c0_i32, %arg0, %c0_i32_0 : i32, i32, i32
  }
  func.func @transform_5(%arg0: i32) -> (i32, i32, i32) {
    %c0_i32 = arith.constant 0 : i32
    %c0_i32_0 = arith.constant 0 : i32
    %c0_i32_1 = arith.constant 0 : i32
    return %c0_i32, %arg0, %c0_i32_0 : i32, i32, i32
  }
}

</mosaic_0001>

<llo_original>
// kernel: tpu_custom_call.1
$region0: #{tpu_custom_call.1}
  #allocation0 [shape = 'u32[]', space=smem, size = 0x4, offset = 0x4, fixed_abs, tag = 'smem constant byte address 0x4 - core index']
  #allocation1 [shape = 'u32[144,128]{1,0:T(1,128)}', space=vmem, size = 0x12000, scoped, tag = 'internal scratch']
  %s0 = inlined_call_operand.vmem [shape: f32[6,2], index: 0, kind: input, shape index: {}]
  %s1 = inlined_call_operand.vmem [shape: f32[6], index: 1, kind: input, shape index: {}]
  %s2 = inlined_call_operand.hbm [shape: f32[2,6], index: 2, kind: input, shape index: {}]
  %s3 = inlined_call_operand.hbm [shape: f32[2], index: 3, kind: input, shape index: {}]
  %s4 = inlined_call_operand.vmem [shape: f32[2,8,128], index: 4, kind: input, shape index: {}]
  %s5 = inlined_call_operand.hbm [shape: f32[2,8,128], index: 5, kind: output, shape index: {}]
  %s6 = sld [smem:[#allocation0]]
  $region46: #{tpu_custom_call.1} parent=0
    _
  %s8 = ssub.s32 1, %s6
  %s9 = scalar_select 0, %s8, %s6
  $region1: #{tpu_custom_call.1} parent=0
    #allocation2 [shape = 'u8[4096]{0}', space=smem, size = 0x1000, scoped, tag = 'input window, operand 0, single buffered']
    #allocation3 [shape = 's32[1]{0}', space=sflag, size = 0x4, scoped, tag = 'scoped memory for tpu_custom_call.1']
    #allocation4 [shape = 's32[1]{0}', space=sflag, size = 0x4, scoped, tag = 'scoped memory for tpu_custom_call.1']
    #allocation5 [shape = 's32[1]{0}', space=sflag, size = 0x4, scoped, tag = 'scoped memory for tpu_custom_call.1']
    #allocation6 [shape = 'u8[512]{0}', space=smem, size = 0x200, scoped, tag = 'input window, operand 1, single buffered']
    #allocation7 [shape = 's32[1]{0}', space=sflag, size = 0x4, scoped, tag = 'scoped memory for tpu_custom_call.1']
    #allocation8 [shape = 'u8[1024]{0}', space=smem, size = 0x400, scoped, tag = 'input window, operand 2, single buffered']
    #allocation9 [shape = 'u8[512]{0}', space=smem, size = 0x200, scoped, tag = 'input window, operand 3, single buffered']
    #allocation10 [shape = 's32[1]{0}', space=sflag, size = 0x4, scoped, tag = 'scoped memory for tpu_custom_call.1']
    #allocation11 [shape = 'u8[8192]{0}', space=vmem, size = 0x2000, scoped, tag = 'output window, operand 0, single buffered']
    %10 = vsyncpa [#allocation5], 0
    %11 = vsyncpa [#allocation7], 0
    %12 = vsyncpa [#allocation4], 0
    %13 = vsyncpa [#allocation10], 0
    %14 = vsyncpa [#allocation3], 0
    // Predicated region
    $region2: #{tpu_custom_call.1} parent=1 // pred_check
      _
    $region3: #{tpu_custom_call.1} parent=1 // pred_check_branch
      %16 = sbr.rel (0) target = $region5
    $region4: #{tpu_custom_call.1} parent=1 // pred_region
      %s18 = ssub.s32 128, 128
      %19 = vsyncadd [#allocation5], %s18
      %s21 = sshll.u32 %s0, 4
      %s22 = int_to_ptr.vmem [resolvable:$true] %s21
      %24 = dma.vmem_to_smem %s22, 128, [#allocation2], [#allocation5]
    $region5: #{tpu_custom_call.1} parent=1 // pred_fallthru
      _
    // Predicated region
    $region6: #{tpu_custom_call.1} parent=1 // pred_check
      _
    $region7: #{tpu_custom_call.1} parent=1 // pred_check_branch
      %26 = sbr.rel (0) target = $region9
    $region8: #{tpu_custom_call.1} parent=1 // pred_region
      %s28 = ssub.s32 16, 16
      %29 = vsyncadd [#allocation7], %s28
      %s31 = sshll.u32 %s1, 4
      %s32 = int_to_ptr.vmem [resolvable:$true] %s31
      %34 = dma.vmem_to_smem %s32, 16, [#allocation6], [#allocation7]
    $region9: #{tpu_custom_call.1} parent=1 // pred_fallthru
      _
    // Predicated region
    $region10: #{tpu_custom_call.1} parent=1 // pred_check
      _
    $region11: #{tpu_custom_call.1} parent=1 // pred_check_branch
      %36 = sbr.rel (0) target = $region13
    $region12: #{tpu_custom_call.1} parent=1 // pred_region
      %s38 = ssub.s32 32, 32
      %39 = vsyncadd [#allocation4], %s38
      %42 = dma.hbm_to_smem %s2, 32, [#allocation8], [#allocation4]
    $region13: #{tpu_custom_call.1} parent=1 // pred_fallthru
      _
    // Predicated region
    $region14: #{tpu_custom_call.1} parent=1 // pred_check
      _
    $region15: #{tpu_custom_call.1} parent=1 // pred_check_branch
      %44 = sbr.rel (0) target = $region17
    $region16: #{tpu_custom_call.1} parent=1 // pred_region
      %s46 = ssub.s32 16, 16
      %47 = vsyncadd [#allocation10], %s46
      %50 = dma.hbm_to_smem %s3, 16, [#allocation9], [#allocation10]
    $region17: #{tpu_custom_call.1} parent=1 // pred_fallthru
      _
    // Predicated region
    $region18: #{tpu_custom_call.1} parent=1 // pred_check
      _
    $region19: #{tpu_custom_call.1} parent=1 // pred_check_branch
      %52 = sbr.rel (0) target = $region21
    $region20: #{tpu_custom_call.1} parent=1 // pred_region
      _
    $region21: #{tpu_custom_call.1} parent=1 // pred_fallthru
      _
    // Predicated region
    $region22: #{tpu_custom_call.1} parent=1 // pred_check
      _
    $region23: #{tpu_custom_call.1} parent=1 // pred_check_branch
      %54 = sbr.rel (0) target = $region25
    $region24: #{tpu_custom_call.1} parent=1 // pred_region
      %55 = dma.done [#allocation5], 128
    $region25: #{tpu_custom_call.1} parent=1 // pred_fallthru
      _
    // Predicated region
    $region26: #{tpu_custom_call.1} parent=1 // pred_check
      _
    $region27: #{tpu_custom_call.1} parent=1 // pred_check_branch
      %57 = sbr.rel (0) target = $region29
    $region28: #{tpu_custom_call.1} parent=1 // pred_region
      %58 = dma.done [#allocation7], 16
    $region29: #{tpu_custom_call.1} parent=1 // pred_fallthru
      _
    // Predicated region
    $region30: #{tpu_custom_call.1} parent=1 // pred_check
      _
    $region31: #{tpu_custom_call.1} parent=1 // pred_check_branch
      %60 = sbr.rel (0) target = $region33
    $region32: #{tpu_custom_call.1} parent=1 // pred_region
      %61 = dma.done [#allocation4], 32
    $region33: #{tpu_custom_call.1} parent=1 // pred_fallthru
      _
    // Predicated region
    $region34: #{tpu_custom_call.1} parent=1 // pred_check
      _
    $region35: #{tpu_custom_call.1} parent=1 // pred_check_branch
      %63 = sbr.rel (0) target = $region37
    $region36: #{tpu_custom_call.1} parent=1 // pred_region
      %64 = dma.done [#allocation10], 16
    $region37: #{tpu_custom_call.1} parent=1 // pred_fallthru
      _
    %65 = sfence
    %s66 = sld [smem:[#allocation9]]
    %s67 = sld [smem:[#allocation9 + $0x1]]
    %v68 = vld [vmem:[%s4] sm:$0xff]
    %s69 = scalar_lea.vmem %s4, 8
    %v70 = vld [vmem:[%s69] sm:$0xff]
    %s71 = sld [smem:[#allocation2]]
    %v72 = vstv %s71
    %v73 = vmul.f32 %v72, %v68
    %s74 = sld [smem:[#allocation2 + $0x1]]
    %v75 = vstv %s74
    %v76 = vmul.f32 %v75, %v70
    %v77 = vadd.f32 %v73, %v76
    %s78 = sld [smem:[#allocation6]]
    %v79 = vstv %s78
    %v80 = vadd.f32 %v77, %v79
    %v81 = vxor.u32 %v80, 2147483648
    %v82 = vmul.f32 %v81, 1.442695
    %v83 = vpow.pop %v82
    %v84 = vadd.f32 %v83, 1.0
    %v85 = vrcp.pop %v84
    %v86 = vmul.f32 1.0, %v85
    %s87 = sld [smem:[#allocation8]]
    %v88 = vstv %s87
    %v89 = vmul.f32 %v88, %v86
    %v90 = vadd.f32 %v89, 0.0
    %s91 = sld [smem:[#allocation8 + $0x80]]
    %v92 = vstv %s91
    %v93 = vmul.f32 %v92, %v86
    %v94 = vadd.f32 %v93, 0.0
    %s95 = sld [smem:[#allocation2 + $0x80]]
    %v96 = vstv %s95
    %v97 = vmul.f32 %v96, %v68
    %s98 = sld [smem:[#allocation2 + $0x81]]
    %v99 = vstv %s98
    %v100 = vmul.f32 %v99, %v70
    %v101 = vadd.f32 %v97, %v100
    %s102 = sld [smem:[#allocation6 + $0x1]]
    %v103 = vstv %s102
    %v104 = vadd.f32 %v101, %v103
    %v105 = vxor.u32 %v104, 2147483648
    %v106 = vmul.f32 %v105, 1.442695
    %v107 = vpow.pop %v106
    %v108 = vadd.f32 %v107, 1.0
    %v109 = vrcp.pop %v108
    %v110 = vmul.f32 1.0, %v109
    %s111 = sld [smem:[#allocation8 + $0x1]]
    %v112 = vstv %s111
    %v113 = vmul.f32 %v112, %v110
    %v114 = vadd.f32 %v90, %v113
    %s115 = sld [smem:[#allocation8 + $0x81]]
    %v116 = vstv %s115
    %v117 = vmul.f32 %v116, %v110
    %v118 = vadd.f32 %v94, %v117
    %s119 = sld [smem:[#allocation2 + $0x100]]
    %v120 = vstv %s119
    %v121 = vmul.f32 %v120, %v68
    %s122 = sld [smem:[#allocation2 + $0x101]]
    %v123 = vstv %s122
    %v124 = vmul.f32 %v123, %v70
    %v125 = vadd.f32 %v121, %v124
    %s126 = sld [smem:[#allocation6 + $0x2]]
    %v127 = vstv %s126
    %v128 = vadd.f32 %v125, %v127
    %v129 = vxor.u32 %v128, 2147483648
    %v130 = vmul.f32 %v129, 1.442695
    %v131 = vpow.pop %v130
    %v132 = vadd.f32 %v131, 1.0
    %v133 = vrcp.pop %v132
    %v134 = vmul.f32 1.0, %v133
    %s135 = sld [smem:[#allocation8 + $0x2]]
    %v136 = vstv %s135
    %v137 = vmul.f32 %v136, %v134
    %v138 = vadd.f32 %v114, %v137
    %s139 = sld [smem:[#allocation8 + $0x82]]
    %v140 = vstv %s139
    %v141 = vmul.f32 %v140, %v134
    %v142 = vadd.f32 %v118, %v141
    %s143 = sld [smem:[#allocation2 + $0x180]]
    %v144 = vstv %s143
    %v145 = vmul.f32 %v144, %v68
    %s146 = sld [smem:[#allocation2 + $0x181]]
    %v147 = vstv %s146
    %v148 = vmul.f32 %v147, %v70
    %v149 = vadd.f32 %v145, %v148
    %s150 = sld [smem:[#allocation6 + $0x3]]
    %v151 = vstv %s150
    %v152 = vadd.f32 %v149, %v151
    %v153 = vxor.u32 %v152, 2147483648
    %v154 = vmul.f32 %v153, 1.442695
    %v155 = vpow.pop %v154
    %v156 = vadd.f32 %v155, 1.0
    %v157 = vrcp.pop %v156
    %v158 = vmul.f32 1.0, %v157
    %s159 = sld [smem:[#allocation8 + $0x3]]
    %v160 = vstv %s159
    %v161 = vmul.f32 %v160, %v158
    %v162 = vadd.f32 %v138, %v161
    %s163 = sld [smem:[#allocation8 + $0x83]]
    %v164 = vstv %s163
    %v165 = vmul.f32 %v164, %v158
    %v166 = vadd.f32 %v142, %v165
    %s167 = sld [smem:[#allocation2 + $0x200]]
    %v168 = vstv %s167
    %v169 = vmul.f32 %v168, %v68
    %s170 = sld [smem:[#allocation2 + $0x201]]
    %v171 = vstv %s170
    %v172 = vmul.f32 %v171, %v70
    %v173 = vadd.f32 %v169, %v172
    %s174 = sld [smem:[#allocation6 + $0x4]]
    %v175 = vstv %s174
    %v176 = vadd.f32 %v173, %v175
    %v177 = vxor.u32 %v176, 2147483648
    %v178 = vmul.f32 %v177, 1.442695
    %v179 = vpow.pop %v178
    %v180 = vadd.f32 %v179, 1.0
    %v181 = vrcp.pop %v180
    %v182 = vmul.f32 1.0, %v181
    %s183 = sld [smem:[#allocation8 + $0x4]]
    %v184 = vstv %s183
    %v185 = vmul.f32 %v184, %v182
    %v186 = vadd.f32 %v162, %v185
    %s187 = sld [smem:[#allocation8 + $0x84]]
    %v188 = vstv %s187
    %v189 = vmul.f32 %v188, %v182
    %v190 = vadd.f32 %v166, %v189
    %s191 = sld [smem:[#allocation2 + $0x280]]
    %v192 = vstv %s191
    %v193 = vmul.f32 %v192, %v68
    %s194 = sld [smem:[#allocation2 + $0x281]]
    %v195 = vstv %s194
    %v196 = vmul.f32 %v195, %v70
    %v197 = vadd.f32 %v193, %v196
    %s198 = sld [smem:[#allocation6 + $0x5]]
    %v199 = vstv %s198
    %v200 = vadd.f32 %v197, %v199
    %v201 = vxor.u32 %v200, 2147483648
    %v202 = vmul.f32 %v201, 1.442695
    %v203 = vpow.pop %v202
    %v204 = vadd.f32 %v203, 1.0
    %v205 = vrcp.pop %v204
    %v206 = vmul.f32 1.0, %v205
    %s207 = sld [smem:[#allocation8 + $0x5]]
    %v208 = vstv %s207
    %v209 = vmul.f32 %v208, %v206
    %v210 = vadd.f32 %v186, %v209
    %s211 = sld [smem:[#allocation8 + $0x85]]
    %v212 = vstv %s211
    %v213 = vmul.f32 %v212, %v206
    %v214 = vadd.f32 %v190, %v213
    %v215 = vstv %s66
    %v216 = vadd.f32 %v210, %v215
    %217 = vst [vmem:[#allocation11] sm:$0xff] %v216
    %v218 = vstv %s67
    %v219 = vadd.f32 %v214, %v218
    %s220 = scalar_lea.vmem [#allocation11], 8
    %221 = vst [vmem:[%s220] sm:$0xff] %v219
    // Predicated region
    $region38: #{tpu_custom_call.1} parent=1 // pred_check
      _
    $region39: #{tpu_custom_call.1} parent=1 // pred_check_branch
      %223 = sbr.rel (0) target = $region41
    $region40: #{tpu_custom_call.1} parent=1 // pred_region
      %s225 = ssub.s32 256, 256
      %226 = vsyncadd [#allocation3], %s225
      %s227 = sshll.u32 [#allocation11], 4
      %s228 = int_to_ptr.vmem [resolvable:$true] %s227
      %233 = dma.vmem_to_hbm [thread:$0]  %s228, 256, %s5, [#allocation3], 128, 128, 8
    $region41: #{tpu_custom_call.1} parent=1 // pred_fallthru
      _
    // Predicated region
    $region42: #{tpu_custom_call.1} parent=1 // pred_check
      _
    $region43: #{tpu_custom_call.1} parent=1 // pred_check_branch
      %235 = sbr.rel (0) target = $region45
    $region44: #{tpu_custom_call.1} parent=1 // pred_region
      %236 = dma.done [#allocation3], 256
    $region45: #{tpu_custom_call.1} parent=1 // pred_fallthru
      _
    %237 = vsyncpa [#allocation3], 1
    %238 = vsyncpa [#allocation4], 1
    %239 = vsyncpa [#allocation10], 1
    %240 = vsyncpa [#allocation5], 1
    %241 = vsyncpa [#allocation7], 1

</llo_original>
